<compile_context>
chip_gen: v7x
topology: tpu7x:2x2x1
jax: 0.10.0
libtpu: 0.0.40
codegen_flags: <defaults>
</compile_context>

<pallas_src>
import math

import jax
import jax.numpy as jnp
from jax.experimental import pallas as pl
from jax.experimental.pallas import tpu as pltpu

I_CNN    = 2048   # box feature width (matches the PyTorch module)
NCLS     = 16     # Ncls (chosen for the synthetic test)
NCLS_PAD = 128    # lane-dense padded classifier width
assert NCLS <= NCLS_PAD, "Ncls must fit in the 128-lane padded slab"


def _round_up(n, m):
    return ((n + m - 1) // m) * m


def _default_tb():
    """Per-generation batch tile: 1024 on v6e, 512 on v5e / v7x / unknown."""
    try:
        kind = jax.devices()[0].device_kind.lower()
    except Exception:
        return 512
    return 1024 if "v6" in kind else 512


def _imodel_kernel(x_ref, w_ref, b_ref, out_ref):
    """out = x @ w + b for one batch tile.

    x_ref  : [TB, I_CNN]       box-0 features (f32 or bf16, VMEM)
    w_ref  : [I_CNN, NCLS_PAD] classifier weight (bf16, zero past NCLS, resident)
    b_ref  : [1, NCLS_PAD]     classifier bias (f32, zero past NCLS, resident)
    out_ref: [TB, NCLS_PAD]    f32 logits (padded lanes hold exact zeros)
    """
    x = x_ref[...]
    if x.dtype != jnp.bfloat16:
        # f32 activations: promote the bf16 weight once per tile (VPU, hidden
        # under the x DMA) and take the f32 MXU path.
        x = x.astype(jnp.float32)
        w = w_ref[...].astype(jnp.float32)
    else:
        # bf16 activations from the producer: native bf16 MXU path, f32 acc.
        w = w_ref[...]
    out_ref[...] = (
        jnp.dot(x, w, preferred_element_type=jnp.float32) + b_ref[...]
    )


def imodel_forward(params, box_feats, *, tb=None, trim=True):
    """box_feats: [B, Nbox, I_CNN] float32/bfloat16.

    Returns [B, NCLS] f32 logits (or the lane-dense [B, NCLS_PAD] slab if
    trim=False, which skips the post-kernel slice for latency-critical paths).
    """
    B, nbox, icnn = box_feats.shape
    assert icnn == I_CNN, f"expected feature width {I_CNN}, got {icnn}"

    if tb is None:
        tb = _default_tb()
    # Right-size the tile for small batches (avoids dead-row DMA) while
    # keeping it a multiple of 8 sublanes.
    tb = max(8, min(tb, _round_up(B, 8)))

    # Free, contiguous view: box-0 == columns [0, I_CNN) of the flattened row.
    x = box_feats.reshape(B, nbox * icnn)

    out = pl.pallas_call(
        _imodel_kernel,
        out_shape=jax.ShapeDtypeStruct((B, NCLS_PAD), jnp.float32),
        grid_spec=pltpu.PrefetchScalarGridSpec(
            num_scalar_prefetch=0,
            grid=(pl.cdiv(B, tb),),
            in_specs=[
                # Only the box-0 columns of each batch tile are DMA'd.
                pl.BlockSpec((tb, I_CNN), lambda i: (i, 0)),
                # Constant index_maps -> weight/bias resident across tiles.
                pl.BlockSpec((I_CNN, NCLS_PAD), lambda i: (0, 0)),
                pl.BlockSpec((1, NCLS_PAD), lambda i: (0, 0)),
            ],
            out_specs=pl.BlockSpec((tb, NCLS_PAD), lambda i: (i, 0)),
        ),
        compiler_params=pltpu.CompilerParams(
            dimension_semantics=("parallel",)),  # megacore batch sharding (v7x)
    )(x, params["w_pad"], params["b_pad"])

    if trim:
        out = out[:, :NCLS]
    return out


def init_params(key):
    """nn.Linear(2048, Ncls)-style init.

    Canonical f32 weights ("w": [I_CNN, NCLS], "b": [NCLS]) are kept for
    reference/export; the kernel consumes the lane-dense bf16 padded copies
    ("w_pad", "b_pad") prepared once here (never per forward call).
    """
    k_w, k_b = jax.random.split(key)
    bound = 1.0 / math.sqrt(I_CNN)
    w = jax.random.uniform(k_w, (I_CNN, NCLS), minval=-bound, maxval=bound,
                           dtype=jnp.float32)
    b = jax.random.uniform(k_b, (NCLS,), minval=-bound, maxval=bound,
                           dtype=jnp.float32)
    w_pad = (jnp.zeros((I_CNN, NCLS_PAD), jnp.bfloat16)
             .at[:, :NCLS].set(w.astype(jnp.bfloat16)))
    b_pad = jnp.zeros((1, NCLS_PAD), jnp.float32).at[0, :NCLS].set(b)
    return {"w": w, "b": b, "w_pad": w_pad, "b_pad": b_pad}


if __name__ == "__main__":
    key = jax.random.PRNGKey(0)
    k_param, k_feat = jax.random.split(key)

    params = init_params(k_param)

    B, NBOX = 2, 4
    box_feats = jax.random.normal(k_feat, (B, NBOX, I_CNN), dtype=jnp.float32)

    out = imodel_forward(params, box_feats)
    jax.block_until_ready(out)
    assert out.shape == (B, NCLS) and out.dtype == jnp.float32

    # Pure-JAX reference against the canonical f32 weights (bf16 kernel
    # weights + MXU f32 path give ~1e-3 error; tolerance stays loose).
    ref = box_feats[:, 0, :] @ params["w"] + params["b"]
    err = float(jnp.max(jnp.abs(out - ref)))
    assert err < 5e-2, f"max abs error {err}"

    print("KERNEL_OK")
</pallas_src>

<mosaic_0001>
module attributes {stable_mosaic.version = 11 : i64} {
  func.func @_imodel_kernel(%arg0: i32, %arg1: memref<8x2048xf32, #tpu.memory_space<vmem>>, %arg2: memref<2048x128xbf16, #tpu.memory_space<vmem>>, %arg3: memref<1x128xf32, #tpu.memory_space<vmem>>, %arg4: memref<8x128xf32, #tpu.memory_space<vmem>>) attributes {dimension_semantics = [#tpu.dimension_semantics<parallel>], iteration_bounds = array<i64: 1>, scalar_prefetch = 0 : i64, scratch_operands = 0 : i64, tpu.core_type = #tpu.core_type<tc>, window_params = [{transform_indices = @transform_0, window_bounds = array<i64: 8, 2048>}, {pipeline_mode = #tpu.pipeline_mode<synchronous>, transform_indices = @transform_1, window_bounds = array<i64: 2048, 128>}, {pipeline_mode = #tpu.pipeline_mode<synchronous>, transform_indices = @transform_2, window_bounds = array<i64: 1, 128>}, {transform_indices = @transform_3, window_bounds = array<i64: 8, 128>}]} {
    %c0 = arith.constant 0 : index
    %c0_0 = arith.constant 0 : index
    %0 = vector.load %arg1[%c0, %c0_0] : memref<8x2048xf32, #tpu.memory_space<vmem>>, vector<8x2048xf32>
    %c0_1 = arith.constant 0 : index
    %c0_2 = arith.constant 0 : index
    %1 = vector.load %arg2[%c0_1, %c0_2] : memref<2048x128xbf16, #tpu.memory_space<vmem>>, vector<2048x128xbf16>
    %2 = arith.extf %1 : vector<2048x128xbf16> to vector<2048x128xf32>
    %cst = arith.constant dense<0.000000e+00> : vector<8x128xf32>
    %3 = tpu.matmul %0, %2, %cst {dimension_numbers = #tpu.dot_dimension_numbers<[1], [0], [0], [1], [0, 0, 1, 1], [], []>} : vector<8x2048xf32>, vector<2048x128xf32>, vector<8x128xf32> -> vector<8x128xf32>
    %c0_3 = arith.constant 0 : index
    %c0_4 = arith.constant 0 : index
    %4 = vector.load %arg3[%c0_3, %c0_4] : memref<1x128xf32, #tpu.memory_space<vmem>>, vector<1x128xf32>
    %5 = vector.broadcast %4 : vector<1x128xf32> to vector<8x128xf32>
    %6 = arith.addf %3, %5 : vector<8x128xf32>
    %c0_5 = arith.constant 0 : index
    %c0_6 = arith.constant 0 : index
    %7 = vector.load %arg4[%c0_5, %c0_6] : memref<8x128xf32, #tpu.memory_space<vmem>>, vector<8x128xf32>
    tpu.vector_store %arg4[%c0_5, %c0_6], %6 {strides = array<i32>} : memref<8x128xf32, #tpu.memory_space<vmem>>, vector<8x128xf32>,
    return
  }
  func.func @transform_0(%arg0: i32) -> (i32, i32) {
    %c0_i32 = arith.constant 0 : i32
    %c0_i32_0 = arith.constant 0 : i32
    return %arg0, %c0_i32 : i32, i32
  }
  func.func @transform_1(%arg0: i32) -> (i32, i32) {
    %c0_i32 = arith.constant 0 : i32
    %c0_i32_0 = arith.constant 0 : i32
    %c0_i32_1 = arith.constant 0 : i32
    return %c0_i32, %c0_i32_0 : i32, i32
  }
  func.func @transform_2(%arg0: i32) -> (i32, i32) {
    %c0_i32 = arith.constant 0 : i32
    %c0_i32_0 = arith.constant 0 : i32
    %c0_i32_1 = arith.constant 0 : i32
    return %c0_i32, %c0_i32_0 : i32, i32
  }
  func.func @transform_3(%arg0: i32) -> (i32, i32) {
    %c0_i32 = arith.constant 0 : i32
    %c0_i32_0 = arith.constant 0 : i32
    return %arg0, %c0_i32 : i32, i32
  }
}

</mosaic_0001>

<llo_original>
// kernel: tpu_custom_call.1
$region0: #{tpu_custom_call.1}
  #allocation0 [shape = 'u32[]', space=smem, size = 0x4, offset = 0x4, fixed_abs, tag = 'smem constant byte address 0x4 - core index']
  #allocation1 [shape = 'u32[144,128]{1,0:T(1,128)}', space=vmem, size = 0x12000, scoped, tag = 'internal scratch']
  %s0 = inlined_call_operand.hbm [shape: f32[2,8192], index: 0, kind: input, shape index: {}]
  %s1 = inlined_call_operand.hbm [shape: bf16[2048,128], index: 1, kind: input, shape index: {}]
  %s2 = inlined_call_operand.vmem [shape: f32[1,128], index: 2, kind: input, shape index: {}]
  %s3 = inlined_call_operand.hbm [shape: f32[2,128], index: 3, kind: output, shape index: {}]
  %s4 = sld [smem:[#allocation0]]
  $region30: #{tpu_custom_call.1} parent=0
    _
  %s6 = ssub.s32 1, %s4
  %s7 = scalar_select 0, %s6, %s4
  $region1: #{tpu_custom_call.1} parent=0
    #allocation2 [shape = 'u8[65536]{0}', space=vmem, size = 0x10000, scoped, tag = 'input window, operand 0, single buffered']
    #allocation3 [shape = 's32[1]{0}', space=sflag, size = 0x4, scoped, tag = 'scoped memory for tpu_custom_call.1']
    #allocation4 [shape = 's32[1]{0}', space=sflag, size = 0x4, scoped, tag = 'scoped memory for tpu_custom_call.1']
    #allocation5 [shape = 'u8[524288]{0}', space=vmem, size = 0x80000, scoped, tag = 'input window, operand 1, single buffered']
    #allocation6 [shape = 's32[1]{0}', space=sflag, size = 0x4, scoped, tag = 'scoped memory for tpu_custom_call.1']
    #allocation7 [shape = 'u8[4096]{0}', space=vmem, size = 0x1000, scoped, tag = 'output window, operand 0, single buffered']
    %8 = vsyncpa [#allocation3], 0
    %9 = vsyncpa [#allocation6], 0
    %10 = vsyncpa [#allocation4], 0
    // Predicated region
    $region2: #{tpu_custom_call.1} parent=1 // pred_check
      _
    $region3: #{tpu_custom_call.1} parent=1 // pred_check_branch
      %12 = sbr.rel (0) target = $region5
    $region4: #{tpu_custom_call.1} parent=1 // pred_region
      %s14 = ssub.s32 2048, 512
      %15 = vsyncadd [#allocation3], %s14
      %s16 = sshll.u32 [#allocation2], 4
      %s17 = int_to_ptr.vmem [resolvable:$true] %s16
      %22 = dma.hbm_to_vmem [thread:$0]  %s0, 512, %s17, [#allocation3], 2048, 512, 32
    $region5: #{tpu_custom_call.1} parent=1 // pred_fallthru
      _
    // Predicated region
    $region6: #{tpu_custom_call.1} parent=1 // pred_check
      _
    $region7: #{tpu_custom_call.1} parent=1 // pred_check_branch
      %24 = sbr.rel (0) target = $region9
    $region8: #{tpu_custom_call.1} parent=1 // pred_region
      %s26 = ssub.s32 16384, 16384
      %27 = vsyncadd [#allocation6], %s26
      %s28 = sshll.u32 [#allocation5], 4
      %s29 = int_to_ptr.vmem [resolvable:$true] %s28
      %34 = dma.hbm_to_vmem [thread:$0]  %s1, 16384, %s29, [#allocation6], 64, 64, 4
    $region9: #{tpu_custom_call.1} parent=1 // pred_fallthru
      _
    // Predicated region
    $region10: #{tpu_custom_call.1} parent=1 // pred_check
      _
    $region11: #{tpu_custom_call.1} parent=1 // pred_check_branch
      %36 = sbr.rel (0) target = $region13
    $region12: #{tpu_custom_call.1} parent=1 // pred_region
      _
    $region13: #{tpu_custom_call.1} parent=1 // pred_fallthru
      _
    // Predicated region
    $region14: #{tpu_custom_call.1} parent=1 // pred_check
      _
    $region15: #{tpu_custom_call.1} parent=1 // pred_check_branch
      %38 = sbr.rel (0) target = $region17
    $region16: #{tpu_custom_call.1} parent=1 // pred_region
      %39 = dma.done [#allocation3], 2048
    $region17: #{tpu_custom_call.1} parent=1 // pred_fallthru
      _
    // Predicated region
    $region18: #{tpu_custom_call.1} parent=1 // pred_check
      _
    $region19: #{tpu_custom_call.1} parent=1 // pred_check_branch
      %41 = sbr.rel (0) target = $region21
    $region20: #{tpu_custom_call.1} parent=1 // pred_region
      %42 = dma.done [#allocation6], 16384
    $region21: #{tpu_custom_call.1} parent=1 // pred_fallthru
      _
    %v43 = vld [vmem:[#allocation2] sm:$0xff]
    %v44 = vld [vmem:[#allocation2 + $0x8] sm:$0xff]
    %v45 = vld [vmem:[#allocation2 + $0x10] sm:$0xff]
    %v46 = vld [vmem:[#allocation2 + $0x18] sm:$0xff]
    %v47 = vld [vmem:[#allocation2 + $0x20] sm:$0xff]
    %v48 = vld [vmem:[#allocation2 + $0x28] sm:$0xff]
    %v49 = vld [vmem:[#allocation2 + $0x30] sm:$0xff]
    %v50 = vld [vmem:[#allocation2 + $0x38] sm:$0xff]
    %v51 = vld [vmem:[#allocation2 + $0x40] sm:$0xff]
    %v52 = vld [vmem:[#allocation2 + $0x48] sm:$0xff]
    %v53 = vld [vmem:[#allocation2 + $0x50] sm:$0xff]
    %v54 = vld [vmem:[#allocation2 + $0x58] sm:$0xff]
    %v55 = vld [vmem:[#allocation2 + $0x60] sm:$0xff]
    %v56 = vld [vmem:[#allocation2 + $0x68] sm:$0xff]
    %v57 = vld [vmem:[#allocation2 + $0x70] sm:$0xff]
    %v58 = vld [vmem:[#allocation2 + $0x78] sm:$0xff]
    %v59 = vld [vmem:[#allocation5] sm:$0xf]
    %v60 = vld [vmem:[#allocation5 + $0x4] sm:$0xf]
    %v61 = vld [vmem:[#allocation5 + $0x8] sm:$0xf]
    %v62 = vld [vmem:[#allocation5 + $0xc] sm:$0xf]
    %v63 = vld [vmem:[#allocation5 + $0x10] sm:$0xf]
    %v64 = vld [vmem:[#allocation5 + $0x14] sm:$0xf]
    %v65 = vld [vmem:[#allocation5 + $0x18] sm:$0xf]
    %v66 = vld [vmem:[#allocation5 + $0x1c] sm:$0xf]
    %v67 = vld [vmem:[#allocation5 + $0x20] sm:$0xf]
    %v68 = vld [vmem:[#allocation5 + $0x24] sm:$0xf]
    %v69 = vld [vmem:[#allocation5 + $0x28] sm:$0xf]
    %v70 = vld [vmem:[#allocation5 + $0x2c] sm:$0xf]
    %v71 = vld [vmem:[#allocation5 + $0x30] sm:$0xf]
    %v72 = vld [vmem:[#allocation5 + $0x34] sm:$0xf]
    %v73 = vld [vmem:[#allocation5 + $0x38] sm:$0xf]
    %v74 = vld [vmem:[#allocation5 + $0x3c] sm:$0xf]
    %v75 = vld [vmem:[#allocation5 + $0x40] sm:$0xf]
    %v76 = vld [vmem:[#allocation5 + $0x44] sm:$0xf]
    %v77 = vld [vmem:[#allocation5 + $0x48] sm:$0xf]
    %v78 = vld [vmem:[#allocation5 + $0x4c] sm:$0xf]
    %v79 = vld [vmem:[#allocation5 + $0x50] sm:$0xf]
    %v80 = vld [vmem:[#allocation5 + $0x54] sm:$0xf]
    %v81 = vld [vmem:[#allocation5 + $0x58] sm:$0xf]
    %v82 = vld [vmem:[#allocation5 + $0x5c] sm:$0xf]
    %v83 = vld [vmem:[#allocation5 + $0x60] sm:$0xf]
    %v84 = vld [vmem:[#allocation5 + $0x64] sm:$0xf]
    %v85 = vld [vmem:[#allocation5 + $0x68] sm:$0xf]
    %v86 = vld [vmem:[#allocation5 + $0x6c] sm:$0xf]
    %v87 = vld [vmem:[#allocation5 + $0x70] sm:$0xf]
    %v88 = vld [vmem:[#allocation5 + $0x74] sm:$0xf]
    %v89 = vld [vmem:[#allocation5 + $0x78] sm:$0xf]
    %v90 = vld [vmem:[#allocation5 + $0x7c] sm:$0xf]
    %v91 = vld [vmem:[#allocation5 + $0x80] sm:$0xf]
    %v92 = vld [vmem:[#allocation5 + $0x84] sm:$0xf]
    %v93 = vld [vmem:[#allocation5 + $0x88] sm:$0xf]
    %v94 = vld [vmem:[#allocation5 + $0x8c] sm:$0xf]
    %v95 = vld [vmem:[#allocation5 + $0x90] sm:$0xf]
    %v96 = vld [vmem:[#allocation5 + $0x94] sm:$0xf]
    %v97 = vld [vmem:[#allocation5 + $0x98] sm:$0xf]
    %v98 = vld [vmem:[#allocation5 + $0x9c] sm:$0xf]
    %v99 = vld [vmem:[#allocation5 + $0xa0] sm:$0xf]
    %v100 = vld [vmem:[#allocation5 + $0xa4] sm:$0xf]
    %v101 = vld [vmem:[#allocation5 + $0xa8] sm:$0xf]
    %v102 = vld [vmem:[#allocation5 + $0xac] sm:$0xf]
    %v103 = vld [vmem:[#allocation5 + $0xb0] sm:$0xf]
    %v104 = vld [vmem:[#allocation5 + $0xb4] sm:$0xf]
    %v105 = vld [vmem:[#allocation5 + $0xb8] sm:$0xf]
    %v106 = vld [vmem:[#allocation5 + $0xbc] sm:$0xf]
    %v107 = vld [vmem:[#allocation5 + $0xc0] sm:$0xf]
    %v108 = vld [vmem:[#allocation5 + $0xc4] sm:$0xf]
    %v109 = vld [vmem:[#allocation5 + $0xc8] sm:$0xf]
    %v110 = vld [vmem:[#allocation5 + $0xcc] sm:$0xf]
    %v111 = vld [vmem:[#allocation5 + $0xd0] sm:$0xf]
    %v112 = vld [vmem:[#allocation5 + $0xd4] sm:$0xf]
    %v113 = vld [vmem:[#allocation5 + $0xd8] sm:$0xf]
    %v114 = vld [vmem:[#allocation5 + $0xdc] sm:$0xf]
    %v115 = vld [vmem:[#allocation5 + $0xe0] sm:$0xf]
    %v116 = vld [vmem:[#allocation5 + $0xe4] sm:$0xf]
    %v117 = vld [vmem:[#allocation5 + $0xe8] sm:$0xf]
    %v118 = vld [vmem:[#allocation5 + $0xec] sm:$0xf]
    %v119 = vld [vmem:[#allocation5 + $0xf0] sm:$0xf]
    %v120 = vld [vmem:[#allocation5 + $0xf4] sm:$0xf]
    %v121 = vld [vmem:[#allocation5 + $0xf8] sm:$0xf]
    %v122 = vld [vmem:[#allocation5 + $0xfc] sm:$0xf]
    %v123 = vld [vmem:[#allocation5 + $0x100] sm:$0xf]
    %v124 = vld [vmem:[#allocation5 + $0x104] sm:$0xf]
    %v125 = vld [vmem:[#allocation5 + $0x108] sm:$0xf]
    %v126 = vld [vmem:[#allocation5 + $0x10c] sm:$0xf]
    %v127 = vld [vmem:[#allocation5 + $0x110] sm:$0xf]
    %v128 = vld [vmem:[#allocation5 + $0x114] sm:$0xf]
    %v129 = vld [vmem:[#allocation5 + $0x118] sm:$0xf]
    %v130 = vld [vmem:[#allocation5 + $0x11c] sm:$0xf]
    %v131 = vld [vmem:[#allocation5 + $0x120] sm:$0xf]
    %v132 = vld [vmem:[#allocation5 + $0x124] sm:$0xf]
    %v133 = vld [vmem:[#allocation5 + $0x128] sm:$0xf]
    %v134 = vld [vmem:[#allocation5 + $0x12c] sm:$0xf]
    %v135 = vld [vmem:[#allocation5 + $0x130] sm:$0xf]
    %v136 = vld [vmem:[#allocation5 + $0x134] sm:$0xf]
    %v137 = vld [vmem:[#allocation5 + $0x138] sm:$0xf]
    %v138 = vld [vmem:[#allocation5 + $0x13c] sm:$0xf]
    %v139 = vld [vmem:[#allocation5 + $0x140] sm:$0xf]
    %v140 = vld [vmem:[#allocation5 + $0x144] sm:$0xf]
    %v141 = vld [vmem:[#allocation5 + $0x148] sm:$0xf]
    %v142 = vld [vmem:[#allocation5 + $0x14c] sm:$0xf]
    %v143 = vld [vmem:[#allocation5 + $0x150] sm:$0xf]
    %v144 = vld [vmem:[#allocation5 + $0x154] sm:$0xf]
    %v145 = vld [vmem:[#allocation5 + $0x158] sm:$0xf]
    %v146 = vld [vmem:[#allocation5 + $0x15c] sm:$0xf]
    %v147 = vld [vmem:[#allocation5 + $0x160] sm:$0xf]
    %v148 = vld [vmem:[#allocation5 + $0x164] sm:$0xf]
    %v149 = vld [vmem:[#allocation5 + $0x168] sm:$0xf]
    %v150 = vld [vmem:[#allocation5 + $0x16c] sm:$0xf]
    %v151 = vld [vmem:[#allocation5 + $0x170] sm:$0xf]
    %v152 = vld [vmem:[#allocation5 + $0x174] sm:$0xf]
    %v153 = vld [vmem:[#allocation5 + $0x178] sm:$0xf]
    %v154 = vld [vmem:[#allocation5 + $0x17c] sm:$0xf]
    %v155 = vld [vmem:[#allocation5 + $0x180] sm:$0xf]
    %v156 = vld [vmem:[#allocation5 + $0x184] sm:$0xf]
    %v157 = vld [vmem:[#allocation5 + $0x188] sm:$0xf]
    %v158 = vld [vmem:[#allocation5 + $0x18c] sm:$0xf]
    %v159 = vld [vmem:[#allocation5 + $0x190] sm:$0xf]
    %v160 = vld [vmem:[#allocation5 + $0x194] sm:$0xf]
    %v161 = vld [vmem:[#allocation5 + $0x198] sm:$0xf]
    %v162 = vld [vmem:[#allocation5 + $0x19c] sm:$0xf]
    %v163 = vld [vmem:[#allocation5 + $0x1a0] sm:$0xf]
    %v164 = vld [vmem:[#allocation5 + $0x1a4] sm:$0xf]
    %v165 = vld [vmem:[#allocation5 + $0x1a8] sm:$0xf]
    %v166 = vld [vmem:[#allocation5 + $0x1ac] sm:$0xf]
    %v167 = vld [vmem:[#allocation5 + $0x1b0] sm:$0xf]
    %v168 = vld [vmem:[#allocation5 + $0x1b4] sm:$0xf]
    %v169 = vld [vmem:[#allocation5 + $0x1b8] sm:$0xf]
    %v170 = vld [vmem:[#allocation5 + $0x1bc] sm:$0xf]
    %v171 = vld [vmem:[#allocation5 + $0x1c0] sm:$0xf]
    %v172 = vld [vmem:[#allocation5 + $0x1c4] sm:$0xf]
    %v173 = vld [vmem:[#allocation5 + $0x1c8] sm:$0xf]
    %v174 = vld [vmem:[#allocation5 + $0x1cc] sm:$0xf]
    %v175 = vld [vmem:[#allocation5 + $0x1d0] sm:$0xf]
    %v176 = vld [vmem:[#allocation5 + $0x1d4] sm:$0xf]
    %v177 = vld [vmem:[#allocation5 + $0x1d8] sm:$0xf]
    %v178 = vld [vmem:[#allocation5 + $0x1dc] sm:$0xf]
    %v179 = vld [vmem:[#allocation5 + $0x1e0] sm:$0xf]
    %v180 = vld [vmem:[#allocation5 + $0x1e4] sm:$0xf]
    %v181 = vld [vmem:[#allocation5 + $0x1e8] sm:$0xf]
    %v182 = vld [vmem:[#allocation5 + $0x1ec] sm:$0xf]
    %v183 = vld [vmem:[#allocation5 + $0x1f0] sm:$0xf]
    %v184 = vld [vmem:[#allocation5 + $0x1f4] sm:$0xf]
    %v185 = vld [vmem:[#allocation5 + $0x1f8] sm:$0xf]
    %v186 = vld [vmem:[#allocation5 + $0x1fc] sm:$0xf]
    %v187 = vld [vmem:[#allocation5 + $0x200] sm:$0xf]
    %v188 = vld [vmem:[#allocation5 + $0x204] sm:$0xf]
    %v189 = vld [vmem:[#allocation5 + $0x208] sm:$0xf]
    %v190 = vld [vmem:[#allocation5 + $0x20c] sm:$0xf]
    %v191 = vld [vmem:[#allocation5 + $0x210] sm:$0xf]
    %v192 = vld [vmem:[#allocation5 + $0x214] sm:$0xf]
    %v193 = vld [vmem:[#allocation5 + $0x218] sm:$0xf]
    %v194 = vld [vmem:[#allocation5 + $0x21c] sm:$0xf]
    %v195 = vld [vmem:[#allocation5 + $0x220] sm:$0xf]
    %v196 = vld [vmem:[#allocation5 + $0x224] sm:$0xf]
    %v197 = vld [vmem:[#allocation5 + $0x228] sm:$0xf]
    %v198 = vld [vmem:[#allocation5 + $0x22c] sm:$0xf]
    %v199 = vld [vmem:[#allocation5 + $0x230] sm:$0xf]
    %v200 = vld [vmem:[#allocation5 + $0x234] sm:$0xf]
    %v201 = vld [vmem:[#allocation5 + $0x238] sm:$0xf]
    %v202 = vld [vmem:[#allocation5 + $0x23c] sm:$0xf]
    %v203 = vld [vmem:[#allocation5 + $0x240] sm:$0xf]
    %v204 = vld [vmem:[#allocation5 + $0x244] sm:$0xf]
    %v205 = vld [vmem:[#allocation5 + $0x248] sm:$0xf]
    %v206 = vld [vmem:[#allocation5 + $0x24c] sm:$0xf]
    %v207 = vld [vmem:[#allocation5 + $0x250] sm:$0xf]
    %v208 = vld [vmem:[#allocation5 + $0x254] sm:$0xf]
    %v209 = vld [vmem:[#allocation5 + $0x258] sm:$0xf]
    %v210 = vld [vmem:[#allocation5 + $0x25c] sm:$0xf]
    %v211 = vld [vmem:[#allocation5 + $0x260] sm:$0xf]
    %v212 = vld [vmem:[#allocation5 + $0x264] sm:$0xf]
    %v213 = vld [vmem:[#allocation5 + $0x268] sm:$0xf]
    %v214 = vld [vmem:[#allocation5 + $0x26c] sm:$0xf]
    %v215 = vld [vmem:[#allocation5 + $0x270] sm:$0xf]
    %v216 = vld [vmem:[#allocation5 + $0x274] sm:$0xf]
    %v217 = vld [vmem:[#allocation5 + $0x278] sm:$0xf]
    %v218 = vld [vmem:[#allocation5 + $0x27c] sm:$0xf]
    %v219 = vld [vmem:[#allocation5 + $0x280] sm:$0xf]
    %v220 = vld [vmem:[#allocation5 + $0x284] sm:$0xf]
    %v221 = vld [vmem:[#allocation5 + $0x288] sm:$0xf]
    %v222 = vld [vmem:[#allocation5 + $0x28c] sm:$0xf]
    %v223 = vld [vmem:[#allocation5 + $0x290] sm:$0xf]
    %v224 = vld [vmem:[#allocation5 + $0x294] sm:$0xf]
    %v225 = vld [vmem:[#allocation5 + $0x298] sm:$0xf]
    %v226 = vld [vmem:[#allocation5 + $0x29c] sm:$0xf]
    %v227 = vld [vmem:[#allocation5 + $0x2a0] sm:$0xf]
    %v228 = vld [vmem:[#allocation5 + $0x2a4] sm:$0xf]
    %v229 = vld [vmem:[#allocation5 + $0x2a8] sm:$0xf]
    %v230 = vld [vmem:[#allocation5 + $0x2ac] sm:$0xf]
    %v231 = vld [vmem:[#allocation5 + $0x2b0] sm:$0xf]
    %v232 = vld [vmem:[#allocation5 + $0x2b4] sm:$0xf]
    %v233 = vld [vmem:[#allocation5 + $0x2b8] sm:$0xf]
    %v234 = vld [vmem:[#allocation5 + $0x2bc] sm:$0xf]
    %v235 = vld [vmem:[#allocation5 + $0x2c0] sm:$0xf]
    %v236 = vld [vmem:[#allocation5 + $0x2c4] sm:$0xf]
    %v237 = vld [vmem:[#allocation5 + $0x2c8] sm:$0xf]
    %v238 = vld [vmem:[#allocation5 + $0x2cc] sm:$0xf]
    %v239 = vld [vmem:[#allocation5 + $0x2d0] sm:$0xf]
    %v240 = vld [vmem:[#allocation5 + $0x2d4] sm:$0xf]
    %v241 = vld [vmem:[#allocation5 + $0x2d8] sm:$0xf]
    %v242 = vld [vmem:[#allocation5 + $0x2dc] sm:$0xf]
    %v243 = vld [vmem:[#allocation5 + $0x2e0] sm:$0xf]
    %v244 = vld [vmem:[#allocation5 + $0x2e4] sm:$0xf]
    %v245 = vld [vmem:[#allocation5 + $0x2e8] sm:$0xf]
    %v246 = vld [vmem:[#allocation5 + $0x2ec] sm:$0xf]
    %v247 = vld [vmem:[#allocation5 + $0x2f0] sm:$0xf]
    %v248 = vld [vmem:[#allocation5 + $0x2f4] sm:$0xf]
    %v249 = vld [vmem:[#allocation5 + $0x2f8] sm:$0xf]
    %v250 = vld [vmem:[#allocation5 + $0x2fc] sm:$0xf]
    %v251 = vld [vmem:[#allocation5 + $0x300] sm:$0xf]
    %v252 = vld [vmem:[#allocation5 + $0x304] sm:$0xf]
    %v253 = vld [vmem:[#allocation5 + $0x308] sm:$0xf]
    %v254 = vld [vmem:[#allocation5 + $0x30c] sm:$0xf]
    %v255 = vld [vmem:[#allocation5 + $0x310] sm:$0xf]
    %v256 = vld [vmem:[#allocation5 + $0x314] sm:$0xf]
    %v257 = vld [vmem:[#allocation5 + $0x318] sm:$0xf]
    %v258 = vld [vmem:[#allocation5 + $0x31c] sm:$0xf]
    %v259 = vld [vmem:[#allocation5 + $0x320] sm:$0xf]
    %v260 = vld [vmem:[#allocation5 + $0x324] sm:$0xf]
    %v261 = vld [vmem:[#allocation5 + $0x328] sm:$0xf]
    %v262 = vld [vmem:[#allocation5 + $0x32c] sm:$0xf]
    %v263 = vld [vmem:[#allocation5 + $0x330] sm:$0xf]
    %v264 = vld [vmem:[#allocation5 + $0x334] sm:$0xf]
    %v265 = vld [vmem:[#allocation5 + $0x338] sm:$0xf]
    %v266 = vld [vmem:[#allocation5 + $0x33c] sm:$0xf]
    %v267 = vld [vmem:[#allocation5 + $0x340] sm:$0xf]
    %v268 = vld [vmem:[#allocation5 + $0x344] sm:$0xf]
    %v269 = vld [vmem:[#allocation5 + $0x348] sm:$0xf]
    %v270 = vld [vmem:[#allocation5 + $0x34c] sm:$0xf]
    %v271 = vld [vmem:[#allocation5 + $0x350] sm:$0xf]
    %v272 = vld [vmem:[#allocation5 + $0x354] sm:$0xf]
    %v273 = vld [vmem:[#allocation5 + $0x358] sm:$0xf]
    %v274 = vld [vmem:[#allocation5 + $0x35c] sm:$0xf]
    %v275 = vld [vmem:[#allocation5 + $0x360] sm:$0xf]
    %v276 = vld [vmem:[#allocation5 + $0x364] sm:$0xf]
    %v277 = vld [vmem:[#allocation5 + $0x368] sm:$0xf]
    %v278 = vld [vmem:[#allocation5 + $0x36c] sm:$0xf]
    %v279 = vld [vmem:[#allocation5 + $0x370] sm:$0xf]
    %v280 = vld [vmem:[#allocation5 + $0x374] sm:$0xf]
    %v281 = vld [vmem:[#allocation5 + $0x378] sm:$0xf]
    %v282 = vld [vmem:[#allocation5 + $0x37c] sm:$0xf]
    %v283 = vld [vmem:[#allocation5 + $0x380] sm:$0xf]
    %v284 = vld [vmem:[#allocation5 + $0x384] sm:$0xf]
    %v285 = vld [vmem:[#allocation5 + $0x388] sm:$0xf]
    %v286 = vld [vmem:[#allocation5 + $0x38c] sm:$0xf]
    %v287 = vld [vmem:[#allocation5 + $0x390] sm:$0xf]
    %v288 = vld [vmem:[#allocation5 + $0x394] sm:$0xf]
    %v289 = vld [vmem:[#allocation5 + $0x398] sm:$0xf]
    %v290 = vld [vmem:[#allocation5 + $0x39c] sm:$0xf]
    %v291 = vld [vmem:[#allocation5 + $0x3a0] sm:$0xf]
    %v292 = vld [vmem:[#allocation5 + $0x3a4] sm:$0xf]
    %v293 = vld [vmem:[#allocation5 + $0x3a8] sm:$0xf]
    %v294 = vld [vmem:[#allocation5 + $0x3ac] sm:$0xf]
    %v295 = vld [vmem:[#allocation5 + $0x3b0] sm:$0xf]
    %v296 = vld [vmem:[#allocation5 + $0x3b4] sm:$0xf]
    %v297 = vld [vmem:[#allocation5 + $0x3b8] sm:$0xf]
    %v298 = vld [vmem:[#allocation5 + $0x3bc] sm:$0xf]
    %v299 = vld [vmem:[#allocation5 + $0x3c0] sm:$0xf]
    %v300 = vld [vmem:[#allocation5 + $0x3c4] sm:$0xf]
    %v301 = vld [vmem:[#allocation5 + $0x3c8] sm:$0xf]
    %v302 = vld [vmem:[#allocation5 + $0x3cc] sm:$0xf]
    %v303 = vld [vmem:[#allocation5 + $0x3d0] sm:$0xf]
    %v304 = vld [vmem:[#allocation5 + $0x3d4] sm:$0xf]
    %v305 = vld [vmem:[#allocation5 + $0x3d8] sm:$0xf]
    %v306 = vld [vmem:[#allocation5 + $0x3dc] sm:$0xf]
    %v307 = vld [vmem:[#allocation5 + $0x3e0] sm:$0xf]
    %v308 = vld [vmem:[#allocation5 + $0x3e4] sm:$0xf]
    %v309 = vld [vmem:[#allocation5 + $0x3e8] sm:$0xf]
    %v310 = vld [vmem:[#allocation5 + $0x3ec] sm:$0xf]
    %v311 = vld [vmem:[#allocation5 + $0x3f0] sm:$0xf]
    %v312 = vld [vmem:[#allocation5 + $0x3f4] sm:$0xf]
    %v313 = vld [vmem:[#allocation5 + $0x3f8] sm:$0xf]
    %v314 = vld [vmem:[#allocation5 + $0x3fc] sm:$0xf]
    %v315 = vunpack.c.l.bf16 %v59
    %v316 = vunpack.c.l.bf16 %v60
    %v317 = vunpack.c.l.bf16 %v61
    %v318 = vunpack.c.l.bf16 %v62
    %v319 = vunpack.c.l.bf16 %v63
    %v320 = vunpack.c.l.bf16 %v64
    %v321 = vunpack.c.l.bf16 %v65
    %v322 = vunpack.c.l.bf16 %v66
    %v323 = vunpack.c.l.bf16 %v67
    %v324 = vunpack.c.l.bf16 %v68
    %v325 = vunpack.c.l.bf16 %v69
    %v326 = vunpack.c.l.bf16 %v70
    %v327 = vunpack.c.l.bf16 %v71
    %v328 = vunpack.c.l.bf16 %v72
    %v329 = vunpack.c.l.bf16 %v73
    %v330 = vunpack.c.l.bf16 %v74
    %v331 = vunpack.c.l.bf16 %v75
    %v332 = vunpack.c.l.bf16 %v76
    %v333 = vunpack.c.l.bf16 %v77
    %v334 = vunpack.c.l.bf16 %v78
    %v335 = vunpack.c.l.bf16 %v79
    %v336 = vunpack.c.l.bf16 %v80
    %v337 = vunpack.c.l.bf16 %v81
    %v338 = vunpack.c.l.bf16 %v82
    %v339 = vunpack.c.l.bf16 %v83
    %v340 = vunpack.c.l.bf16 %v84
    %v341 = vunpack.c.l.bf16 %v85
    %v342 = vunpack.c.l.bf16 %v86
    %v343 = vunpack.c.l.bf16 %v87
    %v344 = vunpack.c.l.bf16 %v88
    %v345 = vunpack.c.l.bf16 %v89
    %v346 = vunpack.c.l.bf16 %v90
    %v347 = vunpack.c.l.bf16 %v91
    %v348 = vunpack.c.l.bf16 %v92
    %v349 = vunpack.c.l.bf16 %v93
    %v350 = vunpack.c.l.bf16 %v94
    %v351 = vunpack.c.l.bf16 %v95
    %v352 = vunpack.c.l.bf16 %v96
    %v353 = vunpack.c.l.bf16 %v97
    %v354 = vunpack.c.l.bf16 %v98
    %v355 = vunpack.c.l.bf16 %v99
    %v356 = vunpack.c.l.bf16 %v100
    %v357 = vunpack.c.l.bf16 %v101
    %v358 = vunpack.c.l.bf16 %v102
    %v359 = vunpack.c.l.bf16 %v103
    %v360 = vunpack.c.l.bf16 %v104
    %v361 = vunpack.c.l.bf16 %v105
    %v362 = vunpack.c.l.bf16 %v106
    %v363 = vunpack.c.l.bf16 %v107
    %v364 = vunpack.c.l.bf16 %v108
    %v365 = vunpack.c.l.bf16 %v109
    %v366 = vunpack.c.l.bf16 %v110
    %v367 = vunpack.c.l.bf16 %v111
    %v368 = vunpack.c.l.bf16 %v112
    %v369 = vunpack.c.l.bf16 %v113
    %v370 = vunpack.c.l.bf16 %v114
    %v371 = vunpack.c.l.bf16 %v115
    %v372 = vunpack.c.l.bf16 %v116
    %v373 = vunpack.c.l.bf16 %v117
    %v374 = vunpack.c.l.bf16 %v118
    %v375 = vunpack.c.l.bf16 %v119
    %v376 = vunpack.c.l.bf16 %v120
    %v377 = vunpack.c.l.bf16 %v121
    %v378 = vunpack.c.l.bf16 %v122
    %v379 = vunpack.c.l.bf16 %v123
    %v380 = vunpack.c.l.bf16 %v124
    %v381 = vunpack.c.l.bf16 %v125
    %v382 = vunpack.c.l.bf16 %v126
    %v383 = vunpack.c.l.bf16 %v127
    %v384 = vunpack.c.l.bf16 %v128
    %v385 = vunpack.c.l.bf16 %v129
    %v386 = vunpack.c.l.bf16 %v130
    %v387 = vunpack.c.l.bf16 %v131
    %v388 = vunpack.c.l.bf16 %v132
    %v389 = vunpack.c.l.bf16 %v133
    %v390 = vunpack.c.l.bf16 %v134
    %v391 = vunpack.c.l.bf16 %v135
    %v392 = vunpack.c.l.bf16 %v136
    %v393 = vunpack.c.l.bf16 %v137
    %v394 = vunpack.c.l.bf16 %v138
    %v395 = vunpack.c.l.bf16 %v139
    %v396 = vunpack.c.l.bf16 %v140
    %v397 = vunpack.c.l.bf16 %v141
    %v398 = vunpack.c.l.bf16 %v142
    %v399 = vunpack.c.l.bf16 %v143
    %v400 = vunpack.c.l.bf16 %v144
    %v401 = vunpack.c.l.bf16 %v145
    %v402 = vunpack.c.l.bf16 %v146
    %v403 = vunpack.c.l.bf16 %v147
    %v404 = vunpack.c.l.bf16 %v148
    %v405 = vunpack.c.l.bf16 %v149
    %v406 = vunpack.c.l.bf16 %v150
    %v407 = vunpack.c.l.bf16 %v151
    %v408 = vunpack.c.l.bf16 %v152
    %v409 = vunpack.c.l.bf16 %v153
    %v410 = vunpack.c.l.bf16 %v154
    %v411 = vunpack.c.l.bf16 %v155
    %v412 = vunpack.c.l.bf16 %v156
    %v413 = vunpack.c.l.bf16 %v157
    %v414 = vunpack.c.l.bf16 %v158
    %v415 = vunpack.c.l.bf16 %v159
    %v416 = vunpack.c.l.bf16 %v160
    %v417 = vunpack.c.l.bf16 %v161
    %v418 = vunpack.c.l.bf16 %v162
    %v419 = vunpack.c.l.bf16 %v163
    %v420 = vunpack.c.l.bf16 %v164
    %v421 = vunpack.c.l.bf16 %v165
    %v422 = vunpack.c.l.bf16 %v166
    %v423 = vunpack.c.l.bf16 %v167
    %v424 = vunpack.c.l.bf16 %v168
    %v425 = vunpack.c.l.bf16 %v169
    %v426 = vunpack.c.l.bf16 %v170
    %v427 = vunpack.c.l.bf16 %v171
    %v428 = vunpack.c.l.bf16 %v172
    %v429 = vunpack.c.l.bf16 %v173
    %v430 = vunpack.c.l.bf16 %v174
    %v431 = vunpack.c.l.bf16 %v175
    %v432 = vunpack.c.l.bf16 %v176
    %v433 = vunpack.c.l.bf16 %v177
    %v434 = vunpack.c.l.bf16 %v178
    %v435 = vunpack.c.l.bf16 %v179
    %v436 = vunpack.c.l.bf16 %v180
    %v437 = vunpack.c.l.bf16 %v181
    %v438 = vunpack.c.l.bf16 %v182
    %v439 = vunpack.c.l.bf16 %v183
    %v440 = vunpack.c.l.bf16 %v184
    %v441 = vunpack.c.l.bf16 %v185
    %v442 = vunpack.c.l.bf16 %v186
    %v443 = vunpack.c.l.bf16 %v187
    %v444 = vunpack.c.l.bf16 %v188
    %v445 = vunpack.c.l.bf16 %v189
    %v446 = vunpack.c.l.bf16 %v190
    %v447 = vunpack.c.l.bf16 %v191
    %v448 = vunpack.c.l.bf16 %v192
    %v449 = vunpack.c.l.bf16 %v193
    %v450 = vunpack.c.l.bf16 %v194
    %v451 = vunpack.c.l.bf16 %v195
    %v452 = vunpack.c.l.bf16 %v196
    %v453 = vunpack.c.l.bf16 %v197
    %v454 = vunpack.c.l.bf16 %v198
    %v455 = vunpack.c.l.bf16 %v199
    %v456 = vunpack.c.l.bf16 %v200
    %v457 = vunpack.c.l.bf16 %v201
    %v458 = vunpack.c.l.bf16 %v202
    %v459 = vunpack.c.l.bf16 %v203
    %v460 = vunpack.c.l.bf16 %v204
    %v461 = vunpack.c.l.bf16 %v205
    %v462 = vunpack.c.l.bf16 %v206
    %v463 = vunpack.c.l.bf16 %v207
    %v464 = vunpack.c.l.bf16 %v208
    %v465 = vunpack.c.l.bf16 %v209
    %v466 = vunpack.c.l.bf16 %v210
    %v467 = vunpack.c.l.bf16 %v211
    %v468 = vunpack.c.l.bf16 %v212
    %v469 = vunpack.c.l.bf16 %v213
    %v470 = vunpack.c.l.bf16 %v214
    %v471 = vunpack.c.l.bf16 %v215
    %v472 = vunpack.c.l.bf16 %v216
    %v473 = vunpack.c.l.bf16 %v217
    %v474 = vunpack.c.l.bf16 %v218
    %v475 = vunpack.c.l.bf16 %v219
    %v476 = vunpack.c.l.bf16 %v220
    %v477 = vunpack.c.l.bf16 %v221
    %v478 = vunpack.c.l.bf16 %v222
    %v479 = vunpack.c.l.bf16 %v223
    %v480 = vunpack.c.l.bf16 %v224
    %v481 = vunpack.c.l.bf16 %v225
    %v482 = vunpack.c.l.bf16 %v226
    %v483 = vunpack.c.l.bf16 %v227
    %v484 = vunpack.c.l.bf16 %v228
    %v485 = vunpack.c.l.bf16 %v229
    %v486 = vunpack.c.l.bf16 %v230
    %v487 = vunpack.c.l.bf16 %v231
    %v488 = vunpack.c.l.bf16 %v232
    %v489 = vunpack.c.l.bf16 %v233
    %v490 = vunpack.c.l.bf16 %v234
    %v491 = vunpack.c.l.bf16 %v235
    %v492 = vunpack.c.l.bf16 %v236
    %v493 = vunpack.c.l.bf16 %v237
    %v494 = vunpack.c.l.bf16 %v238
    %v495 = vunpack.c.l.bf16 %v239
    %v496 = vunpack.c.l.bf16 %v240
    %v497 = vunpack.c.l.bf16 %v241
    %v498 = vunpack.c.l.bf16 %v242
    %v499 = vunpack.c.l.bf16 %v243
    %v500 = vunpack.c.l.bf16 %v244
    %v501 = vunpack.c.l.bf16 %v245
    %v502 = vunpack.c.l.bf16 %v246
    %v503 = vunpack.c.l.bf16 %v247
    %v504 = vunpack.c.l.bf16 %v248
    %v505 = vunpack.c.l.bf16 %v249
    %v506 = vunpack.c.l.bf16 %v250
    %v507 = vunpack.c.l.bf16 %v251
    %v508 = vunpack.c.l.bf16 %v252
    %v509 = vunpack.c.l.bf16 %v253
    %v510 = vunpack.c.l.bf16 %v254
    %v511 = vunpack.c.l.bf16 %v255
    %v512 = vunpack.c.l.bf16 %v256
    %v513 = vunpack.c.l.bf16 %v257
    %v514 = vunpack.c.l.bf16 %v258
    %v515 = vunpack.c.l.bf16 %v259
    %v516 = vunpack.c.l.bf16 %v260
    %v517 = vunpack.c.l.bf16 %v261
    %v518 = vunpack.c.l.bf16 %v262
    %v519 = vunpack.c.l.bf16 %v263
    %v520 = vunpack.c.l.bf16 %v264
    %v521 = vunpack.c.l.bf16 %v265
    %v522 = vunpack.c.l.bf16 %v266
    %v523 = vunpack.c.l.bf16 %v267
    %v524 = vunpack.c.l.bf16 %v268
    %v525 = vunpack.c.l.bf16 %v269
    %v526 = vunpack.c.l.bf16 %v270
    %v527 = vunpack.c.l.bf16 %v271
    %v528 = vunpack.c.l.bf16 %v272
    %v529 = vunpack.c.l.bf16 %v273
    %v530 = vunpack.c.l.bf16 %v274
    %v531 = vunpack.c.l.bf16 %v275
    %v532 = vunpack.c.l.bf16 %v276
    %v533 = vunpack.c.l.bf16 %v277
    %v534 = vunpack.c.l.bf16 %v278
    %v535 = vunpack.c.l.bf16 %v279
    %v536 = vunpack.c.l.bf16 %v280
    %v537 = vunpack.c.l.bf16 %v281
    %v538 = vunpack.c.l.bf16 %v282
    %v539 = vunpack.c.l.bf16 %v283
    %v540 = vunpack.c.l.bf16 %v284
    %v541 = vunpack.c.l.bf16 %v285
    %v542 = vunpack.c.l.bf16 %v286
    %v543 = vunpack.c.l.bf16 %v287
    %v544 = vunpack.c.l.bf16 %v288
    %v545 = vunpack.c.l.bf16 %v289
    %v546 = vunpack.c.l.bf16 %v290
    %v547 = vunpack.c.l.bf16 %v291
    %v548 = vunpack.c.l.bf16 %v292
    %v549 = vunpack.c.l.bf16 %v293
    %v550 = vunpack.c.l.bf16 %v294
    %v551 = vunpack.c.l.bf16 %v295
    %v552 = vunpack.c.l.bf16 %v296
    %v553 = vunpack.c.l.bf16 %v297
    %v554 = vunpack.c.l.bf16 %v298
    %v555 = vunpack.c.l.bf16 %v299
    %v556 = vunpack.c.l.bf16 %v300
    %v557 = vunpack.c.l.bf16 %v301
    %v558 = vunpack.c.l.bf16 %v302
    %v559 = vunpack.c.l.bf16 %v303
    %v560 = vunpack.c.l.bf16 %v304
    %v561 = vunpack.c.l.bf16 %v305
    %v562 = vunpack.c.l.bf16 %v306
    %v563 = vunpack.c.l.bf16 %v307
    %v564 = vunpack.c.l.bf16 %v308
    %v565 = vunpack.c.l.bf16 %v309
    %v566 = vunpack.c.l.bf16 %v310
    %v567 = vunpack.c.l.bf16 %v311
    %v568 = vunpack.c.l.bf16 %v312
    %v569 = vunpack.c.l.bf16 %v313
    %v570 = vunpack.c.l.bf16 %v314
    %v571 = vld [vmem:[%s2] sm:$0x1]
    %v573 = vlaneseq
    %v574 = vshrl.u32 %v573, 7
    %v575 = vsub.s32 0, %v574
    %v576 = vrot.slane %v571, %v575
    %v594 = vcombine.low %v43, %v47
    %v595 = vcombine.high %v43, %v47
    %v596 = vcombine.low %v51, %v55
    %v597 = vcombine.high %v51, %v55
    %v599 = vunpack.c.l.s4 1983009808
    %v600 = vunpack.c.0.s8 %v599
    %v601 = vlaneseq
    %v602 = vshrl.u32 %v601, 7
    %v603 = vsub.s32 %v600, %v602
    %v604 = vrot.slane %v594, %v603
    %v606 = vunpack.c.l.s4 1983009808
    %v607 = vunpack.c.0.s8 %v606
    %v608 = vlaneseq
    %v609 = vshrl.u32 %v608, 7
    %v610 = vsub.s32 %v607, %v609
    %v611 = vrot.slane %v595, %v610
    %v613 = vunpack.c.l.s4 1983009808
    %v614 = vunpack.c.0.s8 %v613
    %v615 = vlaneseq
    %v616 = vshrl.u32 %v615, 7
    %v617 = vsub.s32 %v614, %v616
    %v618 = vrot.slane %v596, %v617
    %v620 = vunpack.c.l.s4 1983009808
    %v621 = vunpack.c.0.s8 %v620
    %v622 = vlaneseq
    %v623 = vshrl.u32 %v622, 7
    %v624 = vsub.s32 %v621, %v623
    %v625 = vrot.slane %v597, %v624
    %v626 = vcombine.low %v604, %v618
    %v627 = vcombine.high %v604, %v618
    %v628 = vcombine.low %v611, %v625
    %v629 = vcombine.high %v611, %v625
    %v630 = vcombine.low %v44, %v48
    %v631 = vcombine.high %v44, %v48
    %v632 = vcombine.low %v52, %v56
    %v633 = vcombine.high %v52, %v56
    %v635 = vunpack.c.l.s4 1983009808
    %v636 = vunpack.c.0.s8 %v635
    %v637 = vlaneseq
    %v638 = vshrl.u32 %v637, 7
    %v639 = vsub.s32 %v636, %v638
    %v640 = vrot.slane %v630, %v639
    %v642 = vunpack.c.l.s4 1983009808
    %v643 = vunpack.c.0.s8 %v642
    %v644 = vlaneseq
    %v645 = vshrl.u32 %v644, 7
    %v646 = vsub.s32 %v643, %v645
    %v647 = vrot.slane %v631, %v646
    %v649 = vunpack.c.l.s4 1983009808
    %v650 = vunpack.c.0.s8 %v649
    %v651 = vlaneseq
    %v652 = vshrl.u32 %v651, 7
    %v653 = vsub.s32 %v650, %v652
    %v654 = vrot.slane %v632, %v653
    %v656 = vunpack.c.l.s4 1983009808
    %v657 = vunpack.c.0.s8 %v656
    %v658 = vlaneseq
    %v659 = vshrl.u32 %v658, 7
    %v660 = vsub.s32 %v657, %v659
    %v661 = vrot.slane %v633, %v660
    %v662 = vcombine.low %v640, %v654
    %v663 = vcombine.high %v640, %v654
    %v664 = vcombine.low %v647, %v661
    %v665 = vcombine.high %v647, %v661
    %v666 = vcombine.low %v45, %v49
    %v667 = vcombine.high %v45, %v49
    %v668 = vcombine.low %v53, %v57
    %v669 = vcombine.high %v53, %v57
    %v671 = vunpack.c.l.s4 1983009808
    %v672 = vunpack.c.0.s8 %v671
    %v673 = vlaneseq
    %v674 = vshrl.u32 %v673, 7
    %v675 = vsub.s32 %v672, %v674
    %v676 = vrot.slane %v666, %v675
    %v678 = vunpack.c.l.s4 1983009808
    %v679 = vunpack.c.0.s8 %v678
    %v680 = vlaneseq
    %v681 = vshrl.u32 %v680, 7
    %v682 = vsub.s32 %v679, %v681
    %v683 = vrot.slane %v667, %v682
    %v685 = vunpack.c.l.s4 1983009808
    %v686 = vunpack.c.0.s8 %v685
    %v687 = vlaneseq
    %v688 = vshrl.u32 %v687, 7
    %v689 = vsub.s32 %v686, %v688
    %v690 = vrot.slane %v668, %v689
    %v692 = vunpack.c.l.s4 1983009808
    %v693 = vunpack.c.0.s8 %v692
    %v694 = vlaneseq
    %v695 = vshrl.u32 %v694, 7
    %v696 = vsub.s32 %v693, %v695
    %v697 = vrot.slane %v669, %v696
    %v698 = vcombine.low %v676, %v690
    %v699 = vcombine.high %v676, %v690
    %v700 = vcombine.low %v683, %v697
    %v701 = vcombine.high %v683, %v697
    %v702 = vcombine.low %v46, %v50
    %v703 = vcombine.high %v46, %v50
    %v704 = vcombine.low %v54, %v58
    %v705 = vcombine.high %v54, %v58
    %v707 = vunpack.c.l.s4 1983009808
    %v708 = vunpack.c.0.s8 %v707
    %v709 = vlaneseq
    %v710 = vshrl.u32 %v709, 7
    %v711 = vsub.s32 %v708, %v710
    %v712 = vrot.slane %v702, %v711
    %v714 = vunpack.c.l.s4 1983009808
    %v715 = vunpack.c.0.s8 %v714
    %v716 = vlaneseq
    %v717 = vshrl.u32 %v716, 7
    %v718 = vsub.s32 %v715, %v717
    %v719 = vrot.slane %v703, %v718
    %v721 = vunpack.c.l.s4 1983009808
    %v722 = vunpack.c.0.s8 %v721
    %v723 = vlaneseq
    %v724 = vshrl.u32 %v723, 7
    %v725 = vsub.s32 %v722, %v724
    %v726 = vrot.slane %v704, %v725
    %v728 = vunpack.c.l.s4 1983009808
    %v729 = vunpack.c.0.s8 %v728
    %v730 = vlaneseq
    %v731 = vshrl.u32 %v730, 7
    %v732 = vsub.s32 %v729, %v731
    %v733 = vrot.slane %v705, %v732
    %v734 = vcombine.low %v712, %v726
    %v735 = vcombine.high %v712, %v726
    %v736 = vcombine.low %v719, %v733
    %v737 = vcombine.high %v719, %v733
    %754 = vmatprep.subr.mxu0 0.0
    %755 = vmatpush1.msra.mxu0 %v315
    %756 = vmatprep.subr.mxu0 0.0
    %757 = vmatpush1.msra.mxu0 %v316
    %758 = vmatprep.subr.mxu0 0.0
    %759 = vmatpush1.msra.mxu0 %v317
    %760 = vmatprep.subr.mxu0 0.0
    %761 = vmatpush1.msra.mxu0 %v318
    %762 = vmatprep.subr.mxu0 0.0
    %763 = vmatpush1.msra.mxu0 %v319
    %764 = vmatprep.subr.mxu0 0.0
    %765 = vmatpush1.msra.mxu0 %v320
    %766 = vmatprep.subr.mxu0 0.0
    %767 = vmatpush1.msra.mxu0 %v321
    %768 = vmatprep.subr.mxu0 0.0
    %769 = vmatpush1.msra.mxu0 %v322
    %770 = vmatprep.subr.mxu0 0.0
    %771 = vmatpush1.msra.mxu0 %v323
    %772 = vmatprep.subr.mxu0 0.0
    %773 = vmatpush1.msra.mxu0 %v324
    %774 = vmatprep.subr.mxu0 0.0
    %775 = vmatpush1.msra.mxu0 %v325
    %776 = vmatprep.subr.mxu0 0.0
    %777 = vmatpush1.msra.mxu0 %v326
    %778 = vmatprep.subr.mxu0 0.0
    %779 = vmatpush1.msra.mxu0 %v327
    %780 = vmatprep.subr.mxu0 0.0
    %781 = vmatpush1.msra.mxu0 %v328
    %782 = vmatprep.subr.mxu0 0.0
    %783 = vmatpush1.msra.mxu0 %v329
    %784 = vmatprep.subr.mxu0 0.0
    %785 = vmatpush1.msra.mxu0 %v330
    %786 = vmatprep.subr.mxu0 0.0
    %787 = vmatpush1.msra.mxu0 %v331
    %788 = vmatprep.subr.mxu0 0.0
    %789 = vmatpush1.msra.mxu0 %v332
    %790 = vmatprep.subr.mxu0 0.0
    %791 = vmatpush1.msra.mxu0 %v333
    %792 = vmatprep.subr.mxu0 0.0
    %793 = vmatpush1.msra.mxu0 %v334
    %794 = vmatprep.subr.mxu0 0.0
    %795 = vmatpush1.msra.mxu0 %v335
    %796 = vmatprep.subr.mxu0 0.0
    %797 = vmatpush1.msra.mxu0 %v336
    %798 = vmatprep.subr.mxu0 0.0
    %799 = vmatpush1.msra.mxu0 %v337
    %800 = vmatprep.subr.mxu0 0.0
    %801 = vmatpush1.msra.mxu0 %v338
    %802 = vmatprep.subr.mxu0 0.0
    %803 = vmatpush1.msra.mxu0 %v339
    %804 = vmatprep.subr.mxu0 0.0
    %805 = vmatpush1.msra.mxu0 %v340
    %806 = vmatprep.subr.mxu0 0.0
    %807 = vmatpush1.msra.mxu0 %v341
    %808 = vmatprep.subr.mxu0 0.0
    %809 = vmatpush1.msra.mxu0 %v342
    %810 = vmatprep.subr.mxu0 0.0
    %811 = vmatpush1.msra.mxu0 %v343
    %812 = vmatprep.subr.mxu0 0.0
    %813 = vmatpush1.msra.mxu0 %v344
    %814 = vmatprep.subr.mxu0 0.0
    %815 = vmatpush1.msra.mxu0 %v345
    %816 = vmatprep.subr.mxu0 0.0
    %817 = vmatpush1.msra.mxu0 %v346
    %818 = vmatprep.mubr.f32.mxu0 %v627
    %819 = vmatmul.mubr.f32.gmra.mrb[0].mxu0 %v626
    %v820 = vpop.f32.mrb[0].mxu0
    %v821 = vadd.f32 %v576, %v820
    %v822 = vpop.f32.mrb[0].mxu0
    %823 = vdwg.mxu0
    %824 = vmatprep.subr.mxu0 0.0
    %825 = vmatpush1.msra.mxu0 %v347
    %826 = vmatprep.subr.mxu0 0.0
    %827 = vmatpush1.msra.mxu0 %v348
    %828 = vmatprep.subr.mxu0 0.0
    %829 = vmatpush1.msra.mxu0 %v349
    %830 = vmatprep.subr.mxu0 0.0
    %831 = vmatpush1.msra.mxu0 %v350
    %832 = vmatprep.subr.mxu0 0.0
    %833 = vmatpush1.msra.mxu0 %v351
    %834 = vmatprep.subr.mxu0 0.0
    %835 = vmatpush1.msra.mxu0 %v352
    %836 = vmatprep.subr.mxu0 0.0
    %837 = vmatpush1.msra.mxu0 %v353
    %838 = vmatprep.subr.mxu0 0.0
    %839 = vmatpush1.msra.mxu0 %v354
    %840 = vmatprep.subr.mxu0 0.0
    %841 = vmatpush1.msra.mxu0 %v355
    %842 = vmatprep.subr.mxu0 0.0
    %843 = vmatpush1.msra.mxu0 %v356
    %844 = vmatprep.subr.mxu0 0.0
    %845 = vmatpush1.msra.mxu0 %v357
    %846 = vmatprep.subr.mxu0 0.0
    %847 = vmatpush1.msra.mxu0 %v358
    %848 = vmatprep.subr.mxu0 0.0
    %849 = vmatpush1.msra.mxu0 %v359
    %850 = vmatprep.subr.mxu0 0.0
    %851 = vmatpush1.msra.mxu0 %v360
    %852 = vmatprep.subr.mxu0 0.0
    %853 = vmatpush1.msra.mxu0 %v361
    %854 = vmatprep.subr.mxu0 0.0
    %855 = vmatpush1.msra.mxu0 %v362
    %856 = vmatprep.subr.mxu0 0.0
    %857 = vmatpush1.msra.mxu0 %v363
    %858 = vmatprep.subr.mxu0 0.0
    %859 = vmatpush1.msra.mxu0 %v364
    %860 = vmatprep.subr.mxu0 0.0
    %861 = vmatpush1.msra.mxu0 %v365
    %862 = vmatprep.subr.mxu0 0.0
    %863 = vmatpush1.msra.mxu0 %v366
    %864 = vmatprep.subr.mxu0 0.0
    %865 = vmatpush1.msra.mxu0 %v367
    %866 = vmatprep.subr.mxu0 0.0
    %867 = vmatpush1.msra.mxu0 %v368
    %868 = vmatprep.subr.mxu0 0.0
    %869 = vmatpush1.msra.mxu0 %v369
    %870 = vmatprep.subr.mxu0 0.0
    %871 = vmatpush1.msra.mxu0 %v370
    %872 = vmatprep.subr.mxu0 0.0
    %873 = vmatpush1.msra.mxu0 %v371
    %874 = vmatprep.subr.mxu0 0.0
    %875 = vmatpush1.msra.mxu0 %v372
    %876 = vmatprep.subr.mxu0 0.0
    %877 = vmatpush1.msra.mxu0 %v373
    %878 = vmatprep.subr.mxu0 0.0
    %879 = vmatpush1.msra.mxu0 %v374
    %880 = vmatprep.subr.mxu0 0.0
    %881 = vmatpush1.msra.mxu0 %v375
    %882 = vmatprep.subr.mxu0 0.0
    %883 = vmatpush1.msra.mxu0 %v376
    %884 = vmatprep.subr.mxu0 0.0
    %885 = vmatpush1.msra.mxu0 %v377
    %886 = vmatprep.subr.mxu0 0.0
    %887 = vmatpush1.msra.mxu0 %v378
    %888 = vmatprep.mubr.f32.mxu0 %v629
    %889 = vmatmul.mubr.f32.gmra.mrb[0].mxu0 %v628
    %v890 = vpop.f32.mrb[0].mxu0
    %v891 = vadd.f32 %v821, %v890
    %v892 = vpop.f32.mrb[0].mxu0
    %893 = vdwg.mxu0
    %894 = vmatprep.subr.mxu0 0.0
    %895 = vmatpush1.msra.mxu0 %v379
    %896 = vmatprep.subr.mxu0 0.0
    %897 = vmatpush1.msra.mxu0 %v380
    %898 = vmatprep.subr.mxu0 0.0
    %899 = vmatpush1.msra.mxu0 %v381
    %900 = vmatprep.subr.mxu0 0.0
    %901 = vmatpush1.msra.mxu0 %v382
    %902 = vmatprep.subr.mxu0 0.0
    %903 = vmatpush1.msra.mxu0 %v383
    %904 = vmatprep.subr.mxu0 0.0
    %905 = vmatpush1.msra.mxu0 %v384
    %906 = vmatprep.subr.mxu0 0.0
    %907 = vmatpush1.msra.mxu0 %v385
    %908 = vmatprep.subr.mxu0 0.0
    %909 = vmatpush1.msra.mxu0 %v386
    %910 = vmatprep.subr.mxu0 0.0
    %911 = vmatpush1.msra.mxu0 %v387
    %912 = vmatprep.subr.mxu0 0.0
    %913 = vmatpush1.msra.mxu0 %v388
    %914 = vmatprep.subr.mxu0 0.0
    %915 = vmatpush1.msra.mxu0 %v389
    %916 = vmatprep.subr.mxu0 0.0
    %917 = vmatpush1.msra.mxu0 %v390
    %918 = vmatprep.subr.mxu0 0.0
    %919 = vmatpush1.msra.mxu0 %v391
    %920 = vmatprep.subr.mxu0 0.0
    %921 = vmatpush1.msra.mxu0 %v392
    %922 = vmatprep.subr.mxu0 0.0
    %923 = vmatpush1.msra.mxu0 %v393
    %924 = vmatprep.subr.mxu0 0.0
    %925 = vmatpush1.msra.mxu0 %v394
    %926 = vmatprep.subr.mxu0 0.0
    %927 = vmatpush1.msra.mxu0 %v395
    %928 = vmatprep.subr.mxu0 0.0
    %929 = vmatpush1.msra.mxu0 %v396
    %930 = vmatprep.subr.mxu0 0.0
    %931 = vmatpush1.msra.mxu0 %v397
    %932 = vmatprep.subr.mxu0 0.0
    %933 = vmatpush1.msra.mxu0 %v398
    %934 = vmatprep.subr.mxu0 0.0
    %935 = vmatpush1.msra.mxu0 %v399
    %936 = vmatprep.subr.mxu0 0.0
    %937 = vmatpush1.msra.mxu0 %v400
    %938 = vmatprep.subr.mxu0 0.0
    %939 = vmatpush1.msra.mxu0 %v401
    %940 = vmatprep.subr.mxu0 0.0
    %941 = vmatpush1.msra.mxu0 %v402
    %942 = vmatprep.subr.mxu0 0.0
    %943 = vmatpush1.msra.mxu0 %v403
    %944 = vmatprep.subr.mxu0 0.0
    %945 = vmatpush1.msra.mxu0 %v404
    %946 = vmatprep.subr.mxu0 0.0
    %947 = vmatpush1.msra.mxu0 %v405
    %948 = vmatprep.subr.mxu0 0.0
    %949 = vmatpush1.msra.mxu0 %v406
    %950 = vmatprep.subr.mxu0 0.0
    %951 = vmatpush1.msra.mxu0 %v407
    %952 = vmatprep.subr.mxu0 0.0
    %953 = vmatpush1.msra.mxu0 %v408
    %954 = vmatprep.subr.mxu0 0.0
    %955 = vmatpush1.msra.mxu0 %v409
    %956 = vmatprep.subr.mxu0 0.0
    %957 = vmatpush1.msra.mxu0 %v410
    %958 = vmatprep.mubr.f32.mxu0 %v663
    %959 = vmatmul.mubr.f32.gmra.mrb[0].mxu0 %v662
    %v960 = vpop.f32.mrb[0].mxu0
    %v961 = vadd.f32 %v891, %v960
    %v962 = vpop.f32.mrb[0].mxu0
    %963 = vdwg.mxu0
    %964 = vmatprep.subr.mxu0 0.0
    %965 = vmatpush1.msra.mxu0 %v411
    %966 = vmatprep.subr.mxu0 0.0
    %967 = vmatpush1.msra.mxu0 %v412
    %968 = vmatprep.subr.mxu0 0.0
    %969 = vmatpush1.msra.mxu0 %v413
    %970 = vmatprep.subr.mxu0 0.0
    %971 = vmatpush1.msra.mxu0 %v414
    %972 = vmatprep.subr.mxu0 0.0
    %973 = vmatpush1.msra.mxu0 %v415
    %974 = vmatprep.subr.mxu0 0.0
    %975 = vmatpush1.msra.mxu0 %v416
    %976 = vmatprep.subr.mxu0 0.0
    %977 = vmatpush1.msra.mxu0 %v417
    %978 = vmatprep.subr.mxu0 0.0
    %979 = vmatpush1.msra.mxu0 %v418
    %980 = vmatprep.subr.mxu0 0.0
    %981 = vmatpush1.msra.mxu0 %v419
    %982 = vmatprep.subr.mxu0 0.0
    %983 = vmatpush1.msra.mxu0 %v420
    %984 = vmatprep.subr.mxu0 0.0
    %985 = vmatpush1.msra.mxu0 %v421
    %986 = vmatprep.subr.mxu0 0.0
    %987 = vmatpush1.msra.mxu0 %v422
    %988 = vmatprep.subr.mxu0 0.0
    %989 = vmatpush1.msra.mxu0 %v423
    %990 = vmatprep.subr.mxu0 0.0
    %991 = vmatpush1.msra.mxu0 %v424
    %992 = vmatprep.subr.mxu0 0.0
    %993 = vmatpush1.msra.mxu0 %v425
    %994 = vmatprep.subr.mxu0 0.0
    %995 = vmatpush1.msra.mxu0 %v426
    %996 = vmatprep.subr.mxu0 0.0
    %997 = vmatpush1.msra.mxu0 %v427
    %998 = vmatprep.subr.mxu0 0.0
    %999 = vmatpush1.msra.mxu0 %v428
    %1000 = vmatprep.subr.mxu0 0.0
    %1001 = vmatpush1.msra.mxu0 %v429
    %1002 = vmatprep.subr.mxu0 0.0
    %1003 = vmatpush1.msra.mxu0 %v430
    %1004 = vmatprep.subr.mxu0 0.0
    %1005 = vmatpush1.msra.mxu0 %v431
    %1006 = vmatprep.subr.mxu0 0.0
    %1007 = vmatpush1.msra.mxu0 %v432
    %1008 = vmatprep.subr.mxu0 0.0
    %1009 = vmatpush1.msra.mxu0 %v433
    %1010 = vmatprep.subr.mxu0 0.0
    %1011 = vmatpush1.msra.mxu0 %v434
    %1012 = vmatprep.subr.mxu0 0.0
    %1013 = vmatpush1.msra.mxu0 %v435
    %1014 = vmatprep.subr.mxu0 0.0
    %1015 = vmatpush1.msra.mxu0 %v436
    %1016 = vmatprep.subr.mxu0 0.0
    %1017 = vmatpush1.msra.mxu0 %v437
    %1018 = vmatprep.subr.mxu0 0.0
    %1019 = vmatpush1.msra.mxu0 %v438
    %1020 = vmatprep.subr.mxu0 0.0
    %1021 = vmatpush1.msra.mxu0 %v439
    %1022 = vmatprep.subr.mxu0 0.0
    %1023 = vmatpush1.msra.mxu0 %v440
    %1024 = vmatprep.subr.mxu0 0.0
    %1025 = vmatpush1.msra.mxu0 %v441
    %1026 = vmatprep.subr.mxu0 0.0
    %1027 = vmatpush1.msra.mxu0 %v442
    %1028 = vmatprep.mubr.f32.mxu0 %v665
    %1029 = vmatmul.mubr.f32.gmra.mrb[0].mxu0 %v664
    %v1030 = vpop.f32.mrb[0].mxu0
    %v1031 = vadd.f32 %v961, %v1030
    %v1032 = vpop.f32.mrb[0].mxu0
    %1033 = vdwg.mxu0
    %1034 = vmatprep.subr.mxu0 0.0
    %1035 = vmatpush1.msra.mxu0 %v443
    %1036 = vmatprep.subr.mxu0 0.0
    %1037 = vmatpush1.msra.mxu0 %v444
    %1038 = vmatprep.subr.mxu0 0.0
    %1039 = vmatpush1.msra.mxu0 %v445
    %1040 = vmatprep.subr.mxu0 0.0
    %1041 = vmatpush1.msra.mxu0 %v446
    %1042 = vmatprep.subr.mxu0 0.0
    %1043 = vmatpush1.msra.mxu0 %v447
    %1044 = vmatprep.subr.mxu0 0.0
    %1045 = vmatpush1.msra.mxu0 %v448
    %1046 = vmatprep.subr.mxu0 0.0
    %1047 = vmatpush1.msra.mxu0 %v449
    %1048 = vmatprep.subr.mxu0 0.0
    %1049 = vmatpush1.msra.mxu0 %v450
    %1050 = vmatprep.subr.mxu0 0.0
    %1051 = vmatpush1.msra.mxu0 %v451
    %1052 = vmatprep.subr.mxu0 0.0
    %1053 = vmatpush1.msra.mxu0 %v452
    %1054 = vmatprep.subr.mxu0 0.0
    %1055 = vmatpush1.msra.mxu0 %v453
    %1056 = vmatprep.subr.mxu0 0.0
    %1057 = vmatpush1.msra.mxu0 %v454
    %1058 = vmatprep.subr.mxu0 0.0
    %1059 = vmatpush1.msra.mxu0 %v455
    %1060 = vmatprep.subr.mxu0 0.0
    %1061 = vmatpush1.msra.mxu0 %v456
    %1062 = vmatprep.subr.mxu0 0.0
    %1063 = vmatpush1.msra.mxu0 %v457
    %1064 = vmatprep.subr.mxu0 0.0
    %1065 = vmatpush1.msra.mxu0 %v458
    %1066 = vmatprep.subr.mxu0 0.0
    %1067 = vmatpush1.msra.mxu0 %v459
    %1068 = vmatprep.subr.mxu0 0.0
    %1069 = vmatpush1.msra.mxu0 %v460
    %1070 = vmatprep.subr.mxu0 0.0
    %1071 = vmatpush1.msra.mxu0 %v461
    %1072 = vmatprep.subr.mxu0 0.0
    %1073 = vmatpush1.msra.mxu0 %v462
    %1074 = vmatprep.subr.mxu0 0.0
    %1075 = vmatpush1.msra.mxu0 %v463
    %1076 = vmatprep.subr.mxu0 0.0
    %1077 = vmatpush1.msra.mxu0 %v464
    %1078 = vmatprep.subr.mxu0 0.0
    %1079 = vmatpush1.msra.mxu0 %v465
    %1080 = vmatprep.subr.mxu0 0.0
    %1081 = vmatpush1.msra.mxu0 %v466
    %1082 = vmatprep.subr.mxu0 0.0
    %1083 = vmatpush1.msra.mxu0 %v467
    %1084 = vmatprep.subr.mxu0 0.0
    %1085 = vmatpush1.msra.mxu0 %v468
    %1086 = vmatprep.subr.mxu0 0.0
    %1087 = vmatpush1.msra.mxu0 %v469
    %1088 = vmatprep.subr.mxu0 0.0
    %1089 = vmatpush1.msra.mxu0 %v470
    %1090 = vmatprep.subr.mxu0 0.0
    %1091 = vmatpush1.msra.mxu0 %v471
    %1092 = vmatprep.subr.mxu0 0.0
    %1093 = vmatpush1.msra.mxu0 %v472
    %1094 = vmatprep.subr.mxu0 0.0
    %1095 = vmatpush1.msra.mxu0 %v473
    %1096 = vmatprep.subr.mxu0 0.0
    %1097 = vmatpush1.msra.mxu0 %v474
    %1098 = vmatprep.mubr.f32.mxu0 %v699
    %1099 = vmatmul.mubr.f32.gmra.mrb[0].mxu0 %v698
    %v1100 = vpop.f32.mrb[0].mxu0
    %v1101 = vadd.f32 %v1031, %v1100
    %v1102 = vpop.f32.mrb[0].mxu0
    %1103 = vdwg.mxu0
    %1104 = vmatprep.subr.mxu0 0.0
    %1105 = vmatpush1.msra.mxu0 %v475
    %1106 = vmatprep.subr.mxu0 0.0
    %1107 = vmatpush1.msra.mxu0 %v476
    %1108 = vmatprep.subr.mxu0 0.0
    %1109 = vmatpush1.msra.mxu0 %v477
    %1110 = vmatprep.subr.mxu0 0.0
    %1111 = vmatpush1.msra.mxu0 %v478
    %1112 = vmatprep.subr.mxu0 0.0
    %1113 = vmatpush1.msra.mxu0 %v479
    %1114 = vmatprep.subr.mxu0 0.0
    %1115 = vmatpush1.msra.mxu0 %v480
    %1116 = vmatprep.subr.mxu0 0.0
    %1117 = vmatpush1.msra.mxu0 %v481
    %1118 = vmatprep.subr.mxu0 0.0
    %1119 = vmatpush1.msra.mxu0 %v482
    %1120 = vmatprep.subr.mxu0 0.0
    %1121 = vmatpush1.msra.mxu0 %v483
    %1122 = vmatprep.subr.mxu0 0.0
    %1123 = vmatpush1.msra.mxu0 %v484
    %1124 = vmatprep.subr.mxu0 0.0
    %1125 = vmatpush1.msra.mxu0 %v485
    %1126 = vmatprep.subr.mxu0 0.0
    %1127 = vmatpush1.msra.mxu0 %v486
    %1128 = vmatprep.subr.mxu0 0.0
    %1129 = vmatpush1.msra.mxu0 %v487
    %1130 = vmatprep.subr.mxu0 0.0
    %1131 = vmatpush1.msra.mxu0 %v488
    %1132 = vmatprep.subr.mxu0 0.0
    %1133 = vmatpush1.msra.mxu0 %v489
    %1134 = vmatprep.subr.mxu0 0.0
    %1135 = vmatpush1.msra.mxu0 %v490
    %1136 = vmatprep.subr.mxu0 0.0
    %1137 = vmatpush1.msra.mxu0 %v491
    %1138 = vmatprep.subr.mxu0 0.0
    %1139 = vmatpush1.msra.mxu0 %v492
    %1140 = vmatprep.subr.mxu0 0.0
    %1141 = vmatpush1.msra.mxu0 %v493
    %1142 = vmatprep.subr.mxu0 0.0
    %1143 = vmatpush1.msra.mxu0 %v494
    %1144 = vmatprep.subr.mxu0 0.0
    %1145 = vmatpush1.msra.mxu0 %v495
    %1146 = vmatprep.subr.mxu0 0.0
    %1147 = vmatpush1.msra.mxu0 %v496
    %1148 = vmatprep.subr.mxu0 0.0
    %1149 = vmatpush1.msra.mxu0 %v497
    %1150 = vmatprep.subr.mxu0 0.0
    %1151 = vmatpush1.msra.mxu0 %v498
    %1152 = vmatprep.subr.mxu0 0.0
    %1153 = vmatpush1.msra.mxu0 %v499
    %1154 = vmatprep.subr.mxu0 0.0
    %1155 = vmatpush1.msra.mxu0 %v500
    %1156 = vmatprep.subr.mxu0 0.0
    %1157 = vmatpush1.msra.mxu0 %v501
    %1158 = vmatprep.subr.mxu0 0.0
    %1159 = vmatpush1.msra.mxu0 %v502
    %1160 = vmatprep.subr.mxu0 0.0
    %1161 = vmatpush1.msra.mxu0 %v503
    %1162 = vmatprep.subr.mxu0 0.0
    %1163 = vmatpush1.msra.mxu0 %v504
    %1164 = vmatprep.subr.mxu0 0.0
    %1165 = vmatpush1.msra.mxu0 %v505
    %1166 = vmatprep.subr.mxu0 0.0
    %1167 = vmatpush1.msra.mxu0 %v506
    %1168 = vmatprep.mubr.f32.mxu0 %v701
    %1169 = vmatmul.mubr.f32.gmra.mrb[0].mxu0 %v700
    %v1170 = vpop.f32.mrb[0].mxu0
    %v1171 = vadd.f32 %v1101, %v1170
    %v1172 = vpop.f32.mrb[0].mxu0
    %1173 = vdwg.mxu0
    %1174 = vmatprep.subr.mxu0 0.0
    %1175 = vmatpush1.msra.mxu0 %v507
    %1176 = vmatprep.subr.mxu0 0.0
    %1177 = vmatpush1.msra.mxu0 %v508
    %1178 = vmatprep.subr.mxu0 0.0
    %1179 = vmatpush1.msra.mxu0 %v509
    %1180 = vmatprep.subr.mxu0 0.0
    %1181 = vmatpush1.msra.mxu0 %v510
    %1182 = vmatprep.subr.mxu0 0.0
    %1183 = vmatpush1.msra.mxu0 %v511
    %1184 = vmatprep.subr.mxu0 0.0
    %1185 = vmatpush1.msra.mxu0 %v512
    %1186 = vmatprep.subr.mxu0 0.0
    %1187 = vmatpush1.msra.mxu0 %v513
    %1188 = vmatprep.subr.mxu0 0.0
    %1189 = vmatpush1.msra.mxu0 %v514
    %1190 = vmatprep.subr.mxu0 0.0
    %1191 = vmatpush1.msra.mxu0 %v515
    %1192 = vmatprep.subr.mxu0 0.0
    %1193 = vmatpush1.msra.mxu0 %v516
    %1194 = vmatprep.subr.mxu0 0.0
    %1195 = vmatpush1.msra.mxu0 %v517
    %1196 = vmatprep.subr.mxu0 0.0
    %1197 = vmatpush1.msra.mxu0 %v518
    %1198 = vmatprep.subr.mxu0 0.0
    %1199 = vmatpush1.msra.mxu0 %v519
    %1200 = vmatprep.subr.mxu0 0.0
    %1201 = vmatpush1.msra.mxu0 %v520
    %1202 = vmatprep.subr.mxu0 0.0
    %1203 = vmatpush1.msra.mxu0 %v521
    %1204 = vmatprep.subr.mxu0 0.0
    %1205 = vmatpush1.msra.mxu0 %v522
    %1206 = vmatprep.subr.mxu0 0.0
    %1207 = vmatpush1.msra.mxu0 %v523
    %1208 = vmatprep.subr.mxu0 0.0
    %1209 = vmatpush1.msra.mxu0 %v524
    %1210 = vmatprep.subr.mxu0 0.0
    %1211 = vmatpush1.msra.mxu0 %v525
    %1212 = vmatprep.subr.mxu0 0.0
    %1213 = vmatpush1.msra.mxu0 %v526
    %1214 = vmatprep.subr.mxu0 0.0
    %1215 = vmatpush1.msra.mxu0 %v527
    %1216 = vmatprep.subr.mxu0 0.0
    %1217 = vmatpush1.msra.mxu0 %v528
    %1218 = vmatprep.subr.mxu0 0.0
    %1219 = vmatpush1.msra.mxu0 %v529
    %1220 = vmatprep.subr.mxu0 0.0
    %1221 = vmatpush1.msra.mxu0 %v530
    %1222 = vmatprep.subr.mxu0 0.0
    %1223 = vmatpush1.msra.mxu0 %v531
    %1224 = vmatprep.subr.mxu0 0.0
    %1225 = vmatpush1.msra.mxu0 %v532
    %1226 = vmatprep.subr.mxu0 0.0
    %1227 = vmatpush1.msra.mxu0 %v533
    %1228 = vmatprep.subr.mxu0 0.0
    %1229 = vmatpush1.msra.mxu0 %v534
    %1230 = vmatprep.subr.mxu0 0.0
    %1231 = vmatpush1.msra.mxu0 %v535
    %1232 = vmatprep.subr.mxu0 0.0
    %1233 = vmatpush1.msra.mxu0 %v536
    %1234 = vmatprep.subr.mxu0 0.0
    %1235 = vmatpush1.msra.mxu0 %v537
    %1236 = vmatprep.subr.mxu0 0.0
    %1237 = vmatpush1.msra.mxu0 %v538
    %1238 = vmatprep.mubr.f32.mxu0 %v735
    %1239 = vmatmul.mubr.f32.gmra.mrb[0].mxu0 %v734
    %v1240 = vpop.f32.mrb[0].mxu0
    %v1241 = vadd.f32 %v1171, %v1240
    %v1242 = vpop.f32.mrb[0].mxu0
    %1243 = vdwg.mxu0
    %1244 = vmatprep.subr.mxu0 0.0
    %1245 = vmatpush1.msra.mxu0 %v539
    %1246 = vmatprep.subr.mxu0 0.0
    %1247 = vmatpush1.msra.mxu0 %v540
    %1248 = vmatprep.subr.mxu0 0.0
    %1249 = vmatpush1.msra.mxu0 %v541
    %1250 = vmatprep.subr.mxu0 0.0
    %1251 = vmatpush1.msra.mxu0 %v542
    %1252 = vmatprep.subr.mxu0 0.0
    %1253 = vmatpush1.msra.mxu0 %v543
    %1254 = vmatprep.subr.mxu0 0.0
    %1255 = vmatpush1.msra.mxu0 %v544
    %1256 = vmatprep.subr.mxu0 0.0
    %1257 = vmatpush1.msra.mxu0 %v545
    %1258 = vmatprep.subr.mxu0 0.0
    %1259 = vmatpush1.msra.mxu0 %v546
    %1260 = vmatprep.subr.mxu0 0.0
    %1261 = vmatpush1.msra.mxu0 %v547
    %1262 = vmatprep.subr.mxu0 0.0
    %1263 = vmatpush1.msra.mxu0 %v548
    %1264 = vmatprep.subr.mxu0 0.0
    %1265 = vmatpush1.msra.mxu0 %v549
    %1266 = vmatprep.subr.mxu0 0.0
    %1267 = vmatpush1.msra.mxu0 %v550
    %1268 = vmatprep.subr.mxu0 0.0
    %1269 = vmatpush1.msra.mxu0 %v551
    %1270 = vmatprep.subr.mxu0 0.0
    %1271 = vmatpush1.msra.mxu0 %v552
    %1272 = vmatprep.subr.mxu0 0.0
    %1273 = vmatpush1.msra.mxu0 %v553
    %1274 = vmatprep.subr.mxu0 0.0
    %1275 = vmatpush1.msra.mxu0 %v554
    %1276 = vmatprep.subr.mxu0 0.0
    %1277 = vmatpush1.msra.mxu0 %v555
    %1278 = vmatprep.subr.mxu0 0.0
    %1279 = vmatpush1.msra.mxu0 %v556
    %1280 = vmatprep.subr.mxu0 0.0
    %1281 = vmatpush1.msra.mxu0 %v557
    %1282 = vmatprep.subr.mxu0 0.0
    %1283 = vmatpush1.msra.mxu0 %v558
    %1284 = vmatprep.subr.mxu0 0.0
    %1285 = vmatpush1.msra.mxu0 %v559
    %1286 = vmatprep.subr.mxu0 0.0
    %1287 = vmatpush1.msra.mxu0 %v560
    %1288 = vmatprep.subr.mxu0 0.0
    %1289 = vmatpush1.msra.mxu0 %v561
    %1290 = vmatprep.subr.mxu0 0.0
    %1291 = vmatpush1.msra.mxu0 %v562
    %1292 = vmatprep.subr.mxu0 0.0
    %1293 = vmatpush1.msra.mxu0 %v563
    %1294 = vmatprep.subr.mxu0 0.0
    %1295 = vmatpush1.msra.mxu0 %v564
    %1296 = vmatprep.subr.mxu0 0.0
    %1297 = vmatpush1.msra.mxu0 %v565
    %1298 = vmatprep.subr.mxu0 0.0
    %1299 = vmatpush1.msra.mxu0 %v566
    %1300 = vmatprep.subr.mxu0 0.0
    %1301 = vmatpush1.msra.mxu0 %v567
    %1302 = vmatprep.subr.mxu0 0.0
    %1303 = vmatpush1.msra.mxu0 %v568
    %1304 = vmatprep.subr.mxu0 0.0
    %1305 = vmatpush1.msra.mxu0 %v569
    %1306 = vmatprep.subr.mxu0 0.0
    %1307 = vmatpush1.msra.mxu0 %v570
    %1308 = vmatprep.mubr.f32.mxu0 %v737
    %1309 = vmatmul.mubr.f32.gmra.mrb[0].mxu0 %v736
    %v1310 = vpop.f32.mrb[0].mxu0
    %v1311 = vadd.f32 %v1241, %v1310
    %v1312 = vpop.f32.mrb[0].mxu0
    %1313 = vdwg.mxu0
    %1314 = vst [vmem:[#allocation7] sm:$0xff] %v1311
    // Predicated region
    $region22: #{tpu_custom_call.1} parent=1 // pred_check
      _
    $region23: #{tpu_custom_call.1} parent=1 // pred_check_branch
      %1316 = sbr.rel (0) target = $region25
    $region24: #{tpu_custom_call.1} parent=1 // pred_region
      %s1318 = ssub.s32 128, 32
      %1319 = vsyncadd [#allocation4], %s1318
      %s1320 = sshll.u32 [#allocation7], 4
      %s1321 = int_to_ptr.vmem [resolvable:$true] %s1320
      %1326 = dma.vmem_to_hbm [thread:$0]  %s1321, 32, %s3, [#allocation4], 32, 32, 2
    $region25: #{tpu_custom_call.1} parent=1 // pred_fallthru
      _
    // Predicated region
    $region26: #{tpu_custom_call.1} parent=1 // pred_check
      _
    $region27: #{tpu_custom_call.1} parent=1 // pred_check_branch
      %1328 = sbr.rel (0) target = $region29
    $region28: #{tpu_custom_call.1} parent=1 // pred_region
      %1329 = dma.done [#allocation4], 128
    $region29: #{tpu_custom_call.1} parent=1 // pred_fallthru
      _
    %1330 = vsyncpa [#allocation3], 1
    %1331 = vsyncpa [#allocation6], 1
    %1332 = vsyncpa [#allocation4], 1

</llo_original>
